<compile_context>
chip_gen: v7x
topology: tpu7x:2x2x1
jax: 0.10.0
libtpu: 0.0.40
codegen_flags: <defaults>
</compile_context>

<pallas_src>
import functools

import jax
import jax.numpy as jnp
import numpy as np
from jax.experimental import pallas as pl
from jax.experimental.pallas import tpu as pltpu

EPS = 1e-5


def _round_up(x, m):
    return ((x + m - 1) // m) * m


# ---------------------------------------------------------------------------
# Fused kernel: streamed scatter_mean -> Linear -> BatchNorm1d -> ReLU -> Linear
# ---------------------------------------------------------------------------
def global_block_kernel(batch_ref, x_ref, w1_ref, b1_ref, g_ref, be_ref,
                        w2_ref, b2_ref, o_ref, seg_acc):
    i = pl.program_id(0)
    n_graphs = seg_acc.shape[0]
    tn = x_ref.shape[0]

    @pl.when(i == 0)
    def _init():
        seg_acc[...] = jnp.zeros_like(seg_acc)

    # ---- per-tile segment sum (scatter_mean numerator + counts) ----------
    # One-hot mask built on the VPU (0/1 exact in bf16); padded nodes carry
    # batch == -1 and never match any graph row.
    b = batch_ref[...]                                             # (1, TN) int32
    g_iota = jax.lax.broadcasted_iota(jnp.int32, (n_graphs, tn), 0)
    mask = (g_iota == b).astype(jnp.bfloat16)                      # (G, TN)
    # x tile already carries a trailing ones column -> a single bf16 MXU dot
    # yields [segment_sum | count]; accumulate in the f32 scratch.
    seg_acc[...] += jnp.dot(mask, x_ref[...],
                            preferred_element_type=jnp.float32)    # (G, hidden+1)

    # ---- finalize MLP on the last node tile -------------------------------
    @pl.when(i == pl.num_programs(0) - 1)
    def _finalize():
        hidden = w1_ref.shape[0]
        seg = seg_acc[...]
        seg_sum = seg[:, :hidden]
        cnt = jnp.maximum(seg[:, hidden:hidden + 1], 1.0)   # empty graph -> 0
        agg = seg_sum / cnt                                  # exact mean (VPU)

        # Linear(hidden, hidden): bf16 operands, f32 accumulation.
        h = jnp.dot(agg.astype(jnp.bfloat16), w1_ref[...],
                    preferred_element_type=jnp.float32) + b1_ref[...]

        # BatchNorm1d: training-mode batch statistics, biased variance.
        mean = jnp.mean(h, axis=0, keepdims=True)
        var = jnp.mean((h - mean) * (h - mean), axis=0, keepdims=True)
        hn = (h - mean) * jax.lax.rsqrt(var + EPS) * g_ref[...] + be_ref[...]

        # ReLU -> Linear(hidden, out_pad): lane-dense 128-wide output slab.
        hr = jnp.maximum(hn, 0.0)
        out = jnp.dot(hr.astype(jnp.bfloat16), w2_ref[...],
                      preferred_element_type=jnp.float32) + b2_ref[...]
        o_ref[...] = out.astype(o_ref.dtype)


# ---------------------------------------------------------------------------
# Wrapper: node-axis grid, resident accumulator, lane-dense padded output
# ---------------------------------------------------------------------------
@functools.partial(jax.jit, static_argnames=("n_graphs", "node_tile"))
def global_block_forward(params, x, edge_index, edge_attr, u, batch, *,
                         n_graphs, node_tile=256):
    del edge_index, edge_attr, u            # unused by GlobalBlock.forward
    n_nodes, hidden = x.shape
    outputs = params["w2"].shape[1]

    # Lane-dense output slab: pad the last Linear to a 128-multiple width.
    out_pad = _round_up(max(outputs, 1), 128)
    w2p = jnp.zeros((hidden, out_pad), jnp.float32).at[:, :outputs].set(params["w2"])
    b2p = jnp.zeros((1, out_pad), jnp.float32).at[:, :outputs].set(params["b2"])

    # Node tile: multiple of 128 keeps v5e's 128-wide MXU aligned; 256 rows of
    # bf16 [x | 1] (double-buffered) fits every generation's scoped-VMEM
    # default (16 MiB v5e, 32 MiB v6e/v7x) with large headroom.
    if n_nodes > node_tile:
        assert node_tile % 128 == 0, "node_tile must be a multiple of 128"
        tn = node_tile
    else:
        tn = _round_up(n_nodes, 8)          # single tile: grid collapses to 1 step
    n_pad = _round_up(n_nodes, tn)
    num_tiles = n_pad // tn

    # Append ones column (counts via the MXU) and pad the node axis; padded
    # nodes get batch == -1 so they match no graph.
    x_aug = jnp.concatenate([x, jnp.ones((n_nodes, 1), x.dtype)], axis=1)
    x_aug = jnp.pad(x_aug, ((0, n_pad - n_nodes), (0, 0))).astype(jnp.bfloat16)
    batch2d = jnp.pad(batch.astype(jnp.int32), (0, n_pad - n_nodes),
                      constant_values=-1).reshape(1, n_pad)

    w1 = params["w1"].astype(jnp.bfloat16)
    w2p = w2p.astype(jnp.bfloat16)

    const = lambda i: (0, 0)                # weights stay VMEM-resident
    cost = pl.CostEstimate(
        flops=2 * n_pad * (hidden + 1) * n_graphs
              + 2 * n_graphs * hidden * (hidden + out_pad),
        transcendentals=hidden,
        bytes_accessed=x_aug.size * 2 + batch2d.size * 4
                       + w1.size * 2 + w2p.size * 2
                       + 4 * (3 * hidden + out_pad) + n_graphs * out_pad * 4)

    out = pl.pallas_call(
        global_block_kernel,
        out_shape=jax.ShapeDtypeStruct((n_graphs, out_pad), jnp.float32),
        grid=(num_tiles,),
        in_specs=[
            pl.BlockSpec((1, tn), lambda i: (0, i)),            # batch ids
            pl.BlockSpec((tn, hidden + 1), lambda i: (i, 0)),   # [x | 1] tile
            pl.BlockSpec((hidden, hidden), const),              # w1 (bf16)
            pl.BlockSpec((1, hidden), const),                   # b1
            pl.BlockSpec((1, hidden), const),                   # gamma
            pl.BlockSpec((1, hidden), const),                   # beta
            pl.BlockSpec((hidden, out_pad), const),             # w2 (padded, bf16)
            pl.BlockSpec((1, out_pad), const),                  # b2 (padded)
        ],
        # Output block is constant across the reduction axis -> stays resident
        # and is written once, under pl.when, on the final tile.
        out_specs=pl.BlockSpec((n_graphs, out_pad), const),
        scratch_shapes=[pltpu.VMEM((n_graphs, hidden + 1), jnp.float32)],
        compiler_params=pltpu.CompilerParams(
            dimension_semantics=("arbitrary",)),   # node axis = reduction axis
        cost_estimate=cost,
    )(batch2d, x_aug, w1, params["b1"], params["gamma"], params["beta"],
      w2p, b2p)
    return out[:, :outputs]


# ---------------------------------------------------------------------------
# Pure-JAX reference with matching bf16-operand / f32-accumulate math
# ---------------------------------------------------------------------------
def global_block_reference(params, x, batch, n_graphs):
    onehot = (jnp.arange(n_graphs)[:, None] == batch[None, :]).astype(jnp.bfloat16)
    seg_sum = jnp.dot(onehot, x.astype(jnp.bfloat16),
                      preferred_element_type=jnp.float32)
    cnt = jnp.maximum(jnp.sum(onehot.astype(jnp.float32), axis=1, keepdims=True), 1.0)
    agg = seg_sum / cnt
    h = jnp.dot(agg.astype(jnp.bfloat16), params["w1"].astype(jnp.bfloat16),
                preferred_element_type=jnp.float32) + params["b1"]
    mean = jnp.mean(h, axis=0, keepdims=True)
    var = jnp.mean((h - mean) ** 2, axis=0, keepdims=True)
    hn = (h - mean) * jax.lax.rsqrt(var + EPS) * params["gamma"] + params["beta"]
    hr = jnp.maximum(hn, 0.0)
    return jnp.dot(hr.astype(jnp.bfloat16), params["w2"].astype(jnp.bfloat16),
                   preferred_element_type=jnp.float32) + params["b2"]


# ---------------------------------------------------------------------------
# Parameter construction (deterministic, PyTorch-Linear-style uniform init)
# ---------------------------------------------------------------------------
def _linear_params(key, fan_in, fan_out):
    k1, k2 = jax.random.split(key)
    bound = 1.0 / float(np.sqrt(fan_in))
    # stored pre-transposed: [fan_in, fan_out] so the kernel computes x @ w
    w = jax.random.uniform(k1, (fan_in, fan_out), jnp.float32, -bound, bound)
    b = jax.random.uniform(k2, (1, fan_out), jnp.float32, -bound, bound)
    return w, b


def init_global_block(key, hidden, outputs):
    k1, k2 = jax.random.split(key)
    w1, b1 = _linear_params(k1, hidden, hidden)
    w2, b2 = _linear_params(k2, hidden, outputs)
    return {
        "w1": w1, "b1": b1,
        "gamma": jnp.ones((1, hidden), jnp.float32),
        "beta": jnp.zeros((1, hidden), jnp.float32),
        "w2": w2, "b2": b2,
    }


# ---------------------------------------------------------------------------
if __name__ == "__main__":
    hidden, outputs = 32, 2

    key = jax.random.PRNGKey(0)
    k_p, k_x1, k_x2, k_e, k_u = jax.random.split(key, 5)
    params = init_global_block(k_p, hidden, outputs)

    # ---- toy shapes (single grid step, matches the original module demo) ----
    n_nodes, n_edges, n_graphs = 16, 32, 2
    x = jax.random.normal(k_x1, (n_nodes, hidden), jnp.float32)
    batch = jnp.repeat(jnp.arange(n_graphs), n_nodes // n_graphs).astype(jnp.int32)
    # edge_index / edge_attr / u are part of the forward signature but unused.
    edge_index = jnp.zeros((2, n_edges), jnp.int32)
    edge_attr = jax.random.normal(k_e, (n_edges, hidden), jnp.float32)
    u = jax.random.normal(k_u, (n_graphs, outputs), jnp.float32)

    out = global_block_forward(params, x, edge_index, edge_attr, u, batch,
                               n_graphs=n_graphs)
    jax.block_until_ready(out)
    assert out.shape == (n_graphs, outputs), out.shape
    ref = global_block_reference(params, x, batch, n_graphs)
    np.testing.assert_allclose(np.asarray(out), np.asarray(ref),
                               rtol=2e-2, atol=2e-2)

    # ---- larger shapes exercising the multi-tile node-axis accumulation ----
    n_nodes2, n_graphs2 = 1024, 8
    x2 = jax.random.normal(k_x2, (n_nodes2, hidden), jnp.float32)
    batch2 = jnp.repeat(jnp.arange(n_graphs2), n_nodes2 // n_graphs2).astype(jnp.int32)
    out2 = global_block_forward(params, x2, edge_index, edge_attr, u, batch2,
                                n_graphs=n_graphs2)
    jax.block_until_ready(out2)
    assert out2.shape == (n_graphs2, outputs), out2.shape
    ref2 = global_block_reference(params, x2, batch2, n_graphs2)
    np.testing.assert_allclose(np.asarray(out2), np.asarray(ref2),
                               rtol=2e-2, atol=2e-2)

    print("KERNEL_OK")
</pallas_src>

<mosaic_0001>
module attributes {stable_mosaic.version = 11 : i64} {
  func.func @global_block_kernel(%arg0: i32, %arg1: memref<1x16xi32, #tpu.memory_space<vmem>>, %arg2: memref<16x33xbf16, #tpu.memory_space<vmem>>, %arg3: memref<32x32xbf16, #tpu.memory_space<vmem>>, %arg4: memref<1x32xf32, #tpu.memory_space<vmem>>, %arg5: memref<1x32xf32, #tpu.memory_space<vmem>>, %arg6: memref<1x32xf32, #tpu.memory_space<vmem>>, %arg7: memref<32x128xbf16, #tpu.memory_space<vmem>>, %arg8: memref<1x128xf32, #tpu.memory_space<vmem>>, %arg9: memref<2x128xf32, #tpu.memory_space<vmem>>, %arg10: memref<2x33xf32, #tpu.memory_space<vmem>>) attributes {dimension_semantics = [#tpu.dimension_semantics<arbitrary>], iteration_bounds = array<i64: 1>, scalar_prefetch = 0 : i64, scratch_operands = 1 : i64, tpu.core_type = #tpu.core_type<tc>, window_params = [{transform_indices = @transform_0, window_bounds = array<i64: 1, 16>}, {transform_indices = @transform_1, window_bounds = array<i64: 16, 33>}, {pipeline_mode = #tpu.pipeline_mode<synchronous>, transform_indices = @transform_2, window_bounds = array<i64: 32, 32>}, {pipeline_mode = #tpu.pipeline_mode<synchronous>, transform_indices = @transform_3, window_bounds = array<i64: 1, 32>}, {pipeline_mode = #tpu.pipeline_mode<synchronous>, transform_indices = @transform_4, window_bounds = array<i64: 1, 32>}, {pipeline_mode = #tpu.pipeline_mode<synchronous>, transform_indices = @transform_5, window_bounds = array<i64: 1, 32>}, {pipeline_mode = #tpu.pipeline_mode<synchronous>, transform_indices = @transform_6, window_bounds = array<i64: 32, 128>}, {pipeline_mode = #tpu.pipeline_mode<synchronous>, transform_indices = @transform_7, window_bounds = array<i64: 1, 128>}, {pipeline_mode = #tpu.pipeline_mode<synchronous>, transform_indices = @transform_8, window_bounds = array<i64: 2, 128>}]} {
    %c0_i32 = arith.constant 0 : i32
    %0 = arith.cmpi eq, %arg0, %c0_i32 : i32
    %1 = arith.extui %0 : i1 to i32
    %c0_i32_0 = arith.constant 0 : i32
    %2 = arith.cmpi ne, %1, %c0_i32_0 : i32
    scf.if %2 {
      %cst_10 = arith.constant 0.000000e+00 : f32
      %18 = vector.broadcast %cst_10 : f32 to vector<2x33xf32>
      %c0_11 = arith.constant 0 : index
      %c0_12 = arith.constant 0 : index
      %19 = vector.load %arg10[%c0_11, %c0_12] : memref<2x33xf32, #tpu.memory_space<vmem>>, vector<2x33xf32>
      tpu.vector_store %arg10[%c0_11, %c0_12], %18 {strides = array<i32>} : memref<2x33xf32, #tpu.memory_space<vmem>>, vector<2x33xf32>,
    } else {
    }
    %c0 = arith.constant 0 : index
    %c0_1 = arith.constant 0 : index
    %3 = vector.load %arg1[%c0, %c0_1] : memref<1x16xi32, #tpu.memory_space<vmem>>, vector<1x16xi32>
    %4 = tpu.iota {dimensions = array<i32: 0>} : vector<2x16xi32>
    %5 = vector.broadcast %3 : vector<1x16xi32> to vector<2x16xi32>
    %6 = arith.cmpi eq, %4, %5 : vector<2x16xi32>
    %7 = arith.extui %6 : vector<2x16xi1> to vector<2x16xi32>
    %8 = arith.sitofp %7 : vector<2x16xi32> to vector<2x16xf32>
    %9 = arith.truncf %8 : vector<2x16xf32> to vector<2x16xbf16>
    %c0_2 = arith.constant 0 : index
    %c0_3 = arith.constant 0 : index
    %10 = vector.load %arg10[%c0_2, %c0_3] : memref<2x33xf32, #tpu.memory_space<vmem>>, vector<2x33xf32>
    %c0_4 = arith.constant 0 : index
    %c0_5 = arith.constant 0 : index
    %11 = vector.load %arg2[%c0_4, %c0_5] : memref<16x33xbf16, #tpu.memory_space<vmem>>, vector<16x33xbf16>
    %cst = arith.constant dense<0.000000e+00> : vector<2x33xf32>
    %12 = tpu.matmul %9, %11, %cst {dimension_numbers = #tpu.dot_dimension_numbers<[1], [0], [0], [1], [0, 0, 1, 1], [], []>} : vector<2x16xbf16>, vector<16x33xbf16>, vector<2x33xf32> -> vector<2x33xf32>
    %13 = arith.addf %10, %12 : vector<2x33xf32>
    %c0_6 = arith.constant 0 : index
    %c0_7 = arith.constant 0 : index
    %14 = vector.load %arg10[%c0_6, %c0_7] : memref<2x33xf32, #tpu.memory_space<vmem>>, vector<2x33xf32>
    tpu.vector_store %arg10[%c0_6, %c0_7], %13 {strides = array<i32>} : memref<2x33xf32, #tpu.memory_space<vmem>>, vector<2x33xf32>,
    %c0_i32_8 = arith.constant 0 : i32
    %15 = arith.cmpi eq, %arg0, %c0_i32_8 : i32
    %16 = arith.extui %15 : i1 to i32
    %c0_i32_9 = arith.constant 0 : i32
    %17 = arith.cmpi ne, %16, %c0_i32_9 : i32
    scf.if %17 {
      %c0_10 = arith.constant 0 : index
      %c0_11 = arith.constant 0 : index
      %18 = vector.load %arg10[%c0_10, %c0_11] : memref<2x33xf32, #tpu.memory_space<vmem>>, vector<2x33xf32>
      %19 = vector.extract_strided_slice %18 {offsets = [0, 0], sizes = [2, 32], strides = [1, 1]} : vector<2x33xf32> to vector<2x32xf32>
      %20 = vector.extract_strided_slice %18 {offsets = [0, 32], sizes = [2, 1], strides = [1, 1]} : vector<2x33xf32> to vector<2x1xf32>
      %cst_12 = arith.constant 1.000000e+00 : f32
      %21 = vector.broadcast %cst_12 : f32 to vector<2x1xf32>
      %22 = arith.maximumf %20, %21 : vector<2x1xf32>
      %23 = vector.broadcast %22 : vector<2x1xf32> to vector<2x32xf32>
      %24 = arith.divf %19, %23 : vector<2x32xf32>
      %25 = arith.truncf %24 : vector<2x32xf32> to vector<2x32xbf16>
      %c0_13 = arith.constant 0 : index
      %c0_14 = arith.constant 0 : index
      %26 = vector.load %arg3[%c0_13, %c0_14] : memref<32x32xbf16, #tpu.memory_space<vmem>>, vector<32x32xbf16>
      %cst_15 = arith.constant dense<0.000000e+00> : vector<2x32xf32>
      %27 = tpu.matmul %25, %26, %cst_15 {dimension_numbers = #tpu.dot_dimension_numbers<[1], [0], [0], [1], [0, 0, 1, 1], [], []>} : vector<2x32xbf16>, vector<32x32xbf16>, vector<2x32xf32> -> vector<2x32xf32>
      %c0_16 = arith.constant 0 : index
      %c0_17 = arith.constant 0 : index
      %28 = vector.load %arg4[%c0_16, %c0_17] : memref<1x32xf32, #tpu.memory_space<vmem>>, vector<1x32xf32>
      %29 = vector.broadcast %28 : vector<1x32xf32> to vector<2x32xf32>
      %30 = arith.addf %27, %29 : vector<2x32xf32>
      %cst_18 = arith.constant dense<0.000000e+00> : vector<32xf32>
      %31 = vector.multi_reduction <add>, %30, %cst_18 [0] : vector<2x32xf32> to vector<32xf32>
      %32 = vector.shape_cast %31 : vector<32xf32> to vector<1x32xf32>
      %cst_19 = arith.constant 2.000000e+00 : f32
      %33 = vector.broadcast %cst_19 : f32 to vector<1x32xf32>
      %34 = arith.divf %32, %33 : vector<1x32xf32>
      %35 = vector.broadcast %34 : vector<1x32xf32> to vector<2x32xf32>
      %36 = arith.subf %30, %35 : vector<2x32xf32>
      %37 = vector.broadcast %34 : vector<1x32xf32> to vector<2x32xf32>
      %38 = arith.subf %30, %37 : vector<2x32xf32>
      %39 = arith.mulf %36, %38 : vector<2x32xf32>
      %cst_20 = arith.constant dense<0.000000e+00> : vector<32xf32>
      %40 = vector.multi_reduction <add>, %39, %cst_20 [0] : vector<2x32xf32> to vector<32xf32>
      %41 = vector.shape_cast %40 : vector<32xf32> to vector<1x32xf32>
      %cst_21 = arith.constant 2.000000e+00 : f32
      %42 = vector.broadcast %cst_21 : f32 to vector<1x32xf32>
      %43 = arith.divf %41, %42 : vector<1x32xf32>
      %44 = vector.broadcast %34 : vector<1x32xf32> to vector<2x32xf32>
      %45 = arith.subf %30, %44 : vector<2x32xf32>
      %cst_22 = arith.constant 9.99999974E-6 : f32
      %46 = vector.broadcast %cst_22 : f32 to vector<1x32xf32>
      %47 = arith.addf %43, %46 : vector<1x32xf32>
      %48 = math.rsqrt %47 : vector<1x32xf32>
      %49 = vector.broadcast %48 : vector<1x32xf32> to vector<2x32xf32>
      %50 = arith.mulf %45, %49 : vector<2x32xf32>
      %c0_23 = arith.constant 0 : index
      %c0_24 = arith.constant 0 : index
      %51 = vector.load %arg5[%c0_23, %c0_24] : memref<1x32xf32, #tpu.memory_space<vmem>>, vector<1x32xf32>
      %52 = vector.broadcast %51 : vector<1x32xf32> to vector<2x32xf32>
      %53 = arith.mulf %50, %52 : vector<2x32xf32>
      %c0_25 = arith.constant 0 : index
      %c0_26 = arith.constant 0 : index
      %54 = vector.load %arg6[%c0_25, %c0_26] : memref<1x32xf32, #tpu.memory_space<vmem>>, vector<1x32xf32>
      %55 = vector.broadcast %54 : vector<1x32xf32> to vector<2x32xf32>
      %56 = arith.addf %53, %55 : vector<2x32xf32>
      %cst_27 = arith.constant 0.000000e+00 : f32
      %57 = vector.broadcast %cst_27 : f32 to vector<2x32xf32>
      %58 = arith.maximumf %56, %57 : vector<2x32xf32>
      %59 = arith.truncf %58 : vector<2x32xf32> to vector<2x32xbf16>
      %c0_28 = arith.constant 0 : index
      %c0_29 = arith.constant 0 : index
      %60 = vector.load %arg7[%c0_28, %c0_29] : memref<32x128xbf16, #tpu.memory_space<vmem>>, vector<32x128xbf16>
      %cst_30 = arith.constant dense<0.000000e+00> : vector<2x128xf32>
      %61 = tpu.matmul %59, %60, %cst_30 {dimension_numbers = #tpu.dot_dimension_numbers<[1], [0], [0], [1], [0, 0, 1, 1], [], []>} : vector<2x32xbf16>, vector<32x128xbf16>, vector<2x128xf32> -> vector<2x128xf32>
      %c0_31 = arith.constant 0 : index
      %c0_32 = arith.constant 0 : index
      %62 = vector.load %arg8[%c0_31, %c0_32] : memref<1x128xf32, #tpu.memory_space<vmem>>, vector<1x128xf32>
      %63 = vector.broadcast %62 : vector<1x128xf32> to vector<2x128xf32>
      %64 = arith.addf %61, %63 : vector<2x128xf32>
      %c0_33 = arith.constant 0 : index
      %c0_34 = arith.constant 0 : index
      %65 = vector.load %arg9[%c0_33, %c0_34] : memref<2x128xf32, #tpu.memory_space<vmem>>, vector<2x128xf32>
      tpu.vector_store %arg9[%c0_33, %c0_34], %64 {strides = array<i32>} : memref<2x128xf32, #tpu.memory_space<vmem>>, vector<2x128xf32>,
    } else {
    }
    return
  }
  func.func @transform_0(%arg0: i32) -> (i32, i32) {
    %c0_i32 = arith.constant 0 : i32
    %c0_i32_0 = arith.constant 0 : i32
    return %c0_i32, %arg0 : i32, i32
  }
  func.func @transform_1(%arg0: i32) -> (i32, i32) {
    %c0_i32 = arith.constant 0 : i32
    %c0_i32_0 = arith.constant 0 : i32
    return %arg0, %c0_i32 : i32, i32
  }
  func.func @transform_2(%arg0: i32) -> (i32, i32) {
    %c0_i32 = arith.constant 0 : i32
    %c0_i32_0 = arith.constant 0 : i32
    %c0_i32_1 = arith.constant 0 : i32
    return %c0_i32, %c0_i32_0 : i32, i32
  }
  func.func @transform_3(%arg0: i32) -> (i32, i32) {
    %c0_i32 = arith.constant 0 : i32
    %c0_i32_0 = arith.constant 0 : i32
    %c0_i32_1 = arith.constant 0 : i32
    return %c0_i32, %c0_i32_0 : i32, i32
  }
  func.func @transform_4(%arg0: i32) -> (i32, i32) {
    %c0_i32 = arith.constant 0 : i32
    %c0_i32_0 = arith.constant 0 : i32
    %c0_i32_1 = arith.constant 0 : i32
    return %c0_i32, %c0_i32_0 : i32, i32
  }
  func.func @transform_5(%arg0: i32) -> (i32, i32) {
    %c0_i32 = arith.constant 0 : i32
    %c0_i32_0 = arith.constant 0 : i32
    %c0_i32_1 = arith.constant 0 : i32
    return %c0_i32, %c0_i32_0 : i32, i32
  }
  func.func @transform_6(%arg0: i32) -> (i32, i32) {
    %c0_i32 = arith.constant 0 : i32
    %c0_i32_0 = arith.constant 0 : i32
    %c0_i32_1 = arith.constant 0 : i32
    return %c0_i32, %c0_i32_0 : i32, i32
  }
  func.func @transform_7(%arg0: i32) -> (i32, i32) {
    %c0_i32 = arith.constant 0 : i32
    %c0_i32_0 = arith.constant 0 : i32
    %c0_i32_1 = arith.constant 0 : i32
    return %c0_i32, %c0_i32_0 : i32, i32
  }
  func.func @transform_8(%arg0: i32) -> (i32, i32) {
    %c0_i32 = arith.constant 0 : i32
    %c0_i32_0 = arith.constant 0 : i32
    %c0_i32_1 = arith.constant 0 : i32
    return %c0_i32, %c0_i32_0 : i32, i32
  }
}

</mosaic_0001>

<llo_original>
// kernel: global_block_forward.1
$region0: #{global_block_forward.1}
  #allocation0 [shape = 'u32[]', space=smem, size = 0x4, offset = 0x4, fixed_abs, tag = 'smem constant byte address 0x4 - core index']
  #allocation1 [shape = 'u32[144,128]{1,0:T(1,128)}', space=vmem, size = 0x12000, scoped, tag = 'internal scratch']
  #allocation2 [shape = 'f32[2,33]{1,0:T(2,128)}', space=vmem, size = 0x400, scoped, tag = 'scratch operand']
  %s0 = inlined_call_operand.vmem [shape: s32[1,16], index: 0, kind: input, shape index: {}]
  %s1 = inlined_call_operand.vmem [shape: bf16[16,33], index: 1, kind: input, shape index: {}]
  %s2 = inlined_call_operand.vmem [shape: bf16[32,32], index: 2, kind: input, shape index: {}]
  %s3 = inlined_call_operand.vmem [shape: f32[1,32], index: 3, kind: input, shape index: {}]
  %s4 = inlined_call_operand.vmem [shape: f32[1,32], index: 4, kind: input, shape index: {}]
  %s5 = inlined_call_operand.vmem [shape: f32[1,32], index: 5, kind: input, shape index: {}]
  %s6 = inlined_call_operand.vmem [shape: bf16[32,128], index: 6, kind: input, shape index: {}]
  %s7 = inlined_call_operand.vmem [shape: f32[1,128], index: 7, kind: input, shape index: {}]
  %s8 = inlined_call_operand.hbm [shape: f32[2,128], index: 8, kind: output, shape index: {}]
  %s9 = sld [smem:[#allocation0]]
  $region50: #{global_block_forward.1} parent=0
    _
  %s11 = ssub.s32 1, %s9
  %s12 = scalar_select 0, %s11, %s9
  $region1: #{global_block_forward.1} parent=0
    #allocation3 [shape = 'u8[1024]{0}', space=vmem, size = 0x400, scoped, tag = 'output window, operand 0, single buffered']
    #allocation4 [shape = 's32[1]{0}', space=sflag, size = 0x4, scoped, tag = 'scoped memory for global_block_forward.1']
    %13 = vsyncpa [#allocation4], 0
    // Predicated region
    $region2: #{global_block_forward.1} parent=1 // pred_check
      _
    $region3: #{global_block_forward.1} parent=1 // pred_check_branch
      %15 = sbr.rel (0) target = $region5
    $region4: #{global_block_forward.1} parent=1 // pred_region
      _
    $region5: #{global_block_forward.1} parent=1 // pred_fallthru
      _
    // Predicated region
    $region6: #{global_block_forward.1} parent=1 // pred_check
      _
    $region7: #{global_block_forward.1} parent=1 // pred_check_branch
      %17 = sbr.rel (0) target = $region9
    $region8: #{global_block_forward.1} parent=1 // pred_region
      _
    $region9: #{global_block_forward.1} parent=1 // pred_fallthru
      _
    // Predicated region
    $region10: #{global_block_forward.1} parent=1 // pred_check
      _
    $region11: #{global_block_forward.1} parent=1 // pred_check_branch
      %19 = sbr.rel (0) target = $region13
    $region12: #{global_block_forward.1} parent=1 // pred_region
      _
    $region13: #{global_block_forward.1} parent=1 // pred_fallthru
      _
    // Predicated region
    $region14: #{global_block_forward.1} parent=1 // pred_check
      _
    $region15: #{global_block_forward.1} parent=1 // pred_check_branch
      %21 = sbr.rel (0) target = $region17
    $region16: #{global_block_forward.1} parent=1 // pred_region
      _
    $region17: #{global_block_forward.1} parent=1 // pred_fallthru
      _
    // Predicated region
    $region18: #{global_block_forward.1} parent=1 // pred_check
      _
    $region19: #{global_block_forward.1} parent=1 // pred_check_branch
      %23 = sbr.rel (0) target = $region21
    $region20: #{global_block_forward.1} parent=1 // pred_region
      _
    $region21: #{global_block_forward.1} parent=1 // pred_fallthru
      _
    // Predicated region
    $region22: #{global_block_forward.1} parent=1 // pred_check
      _
    $region23: #{global_block_forward.1} parent=1 // pred_check_branch
      %25 = sbr.rel (0) target = $region25
    $region24: #{global_block_forward.1} parent=1 // pred_region
      _
    $region25: #{global_block_forward.1} parent=1 // pred_fallthru
      _
    // Predicated region
    $region26: #{global_block_forward.1} parent=1 // pred_check
      _
    $region27: #{global_block_forward.1} parent=1 // pred_check_branch
      %27 = sbr.rel (0) target = $region29
    $region28: #{global_block_forward.1} parent=1 // pred_region
      _
    $region29: #{global_block_forward.1} parent=1 // pred_fallthru
      _
    // Predicated region
    $region30: #{global_block_forward.1} parent=1 // pred_check
      _
    $region31: #{global_block_forward.1} parent=1 // pred_check_branch
      %29 = sbr.rel (0) target = $region33
    $region32: #{global_block_forward.1} parent=1 // pred_region
      _
    $region33: #{global_block_forward.1} parent=1 // pred_fallthru
      _
    %p31 = scmp.eq.s32.totalorder 0, 0
    // Predicated region
    $region34: #{global_block_forward.1} parent=1 // pred_check
      %p32 = pneg %p31
    $region35: #{global_block_forward.1} parent=1 // pred_check_branch
      %34 = sbr.rel (%p32) target = $region37
    $region36: #{global_block_forward.1} parent=1 // pred_region
      %vm35 = vcmask 263168
      %36 = vst.msk [vmem:[#allocation2] sm:$0x3] %vm35, 0.0
    $region37: #{global_block_forward.1} parent=1 // pred_fallthru
      _
    %v37 = vld [vmem:[%s0] sm:$0x1]
    %v38 = vlaneseq
    %v39 = vshrl.u32 %v38, 7
    %v40 = vlaneseq
    %v41 = vshrl.u32 %v40, 7
    %v42 = vsub.s32 0, %v41
    %v43 = vrot.slane %v37, %v42
    %vm44 = vcmp.eq.s32.totalorder %v39, %v43
    %v45 = vsel %vm44, 1, 0
    %v46 = vcvt.s32.f32 %v45
    %v47 = vpack.c.bf16 %v46, %v46
    %v48 = vld [vmem:[#allocation2] sm:$0x3]
    %v49 = vld [vmem:[%s1] sm:$0xf]
    %v50 = vld [vmem:[%s1 + $0x4] sm:$0xf]
    %v53 = vunpack.c.l.b16 %v49
    %v54 = vunpack.c.l.b16 %v50
    %v55 = vpack.c.b16 %v54, %v53
    %vm57 = vcmask 130048
    %v59 = vsel %vm57, %v47, 0
    %61 = vmatprep.subr.bf16.mxu0 0
    %62 = vmatpush1.bf16.msra.mxu0 %v55
    %63 = vmatprep.subr.bf16.mxu0 0
    %64 = vmatpush1.bf16.msra.mxu0 0
    %65 = vmatprep.subr.bf16.mxu0 0
    %66 = vmatpush1.bf16.msra.mxu0 0
    %67 = vmatprep.subr.bf16.mxu0 0
    %68 = vmatpush1.bf16.msra.mxu0 0
    %69 = vmatprep.subr.bf16.mxu0 0
    %70 = vmatpush1.bf16.msra.mxu0 0
    %71 = vmatprep.subr.bf16.mxu0 0
    %72 = vmatpush1.bf16.msra.mxu0 0
    %73 = vmatprep.subr.bf16.mxu0 0
    %74 = vmatpush1.bf16.msra.mxu0 0
    %75 = vmatprep.subr.bf16.mxu0 0
    %76 = vmatpush1.bf16.msra.mxu0 0
    %77 = vmatprep.subr.bf16.mxu0 0
    %78 = vmatpush1.bf16.msra.mxu0 0
    %79 = vmatprep.subr.bf16.mxu0 0
    %80 = vmatpush1.bf16.msra.mxu0 0
    %81 = vmatprep.subr.bf16.mxu0 0
    %82 = vmatpush1.bf16.msra.mxu0 0
    %83 = vmatprep.subr.bf16.mxu0 0
    %84 = vmatpush1.bf16.msra.mxu0 0
    %85 = vmatprep.subr.bf16.mxu0 0
    %86 = vmatpush1.bf16.msra.mxu0 0
    %87 = vmatprep.subr.bf16.mxu0 0
    %88 = vmatpush1.bf16.msra.mxu0 0
    %89 = vmatprep.subr.bf16.mxu0 0
    %90 = vmatpush1.bf16.msra.mxu0 0
    %91 = vmatprep.subr.bf16.mxu0 0
    %92 = vmatpush1.bf16.msra.mxu0 0
    %93 = vmatprep.mubr.bf16.mxu0 0
    %94 = vmatmul.mubr.bf16.gmra.mrb[0].mxu0 %v59
    %v95 = vpop.f32.mrb[0].mxu0
    %v96 = vadd.f32 0.0, %v95
    %v97 = vpop.f32.mrb[0].mxu0
    %v98 = vpop.f32.mrb[0].mxu0
    %v99 = vpop.f32.mrb[0].mxu0
    %100 = vdwg.mxu0
    %v101 = vadd.f32 %v48, %v96
    %vm102 = vcmask 263168
    %103 = vst.msk [vmem:[#allocation2] sm:$0x3] %vm102, %v101
    // Predicated region
    $region38: #{global_block_forward.1} parent=1 // pred_check
      %p104 = pneg %p31
    $region39: #{global_block_forward.1} parent=1 // pred_check_branch
      %106 = sbr.rel (%p104) target = $region41
    $region40: #{global_block_forward.1} parent=1 // pred_region
      %v107 = vld [vmem:[#allocation2] sm:$0x3]
      %v108 = vmax.f32 %v107, 1.0
      %110 = vset.pattern.permute.xlu0 32
      %111 = vperm.xlu0 %110, %v108
      %v112 = vpop.permute.xlu0 %111
      %v114 = vrcp.pop %v112
      %v115 = vmul.f32 %v107, %v114
      %v116 = vpack.c.bf16 %v115, %v115
      %v117 = vld [vmem:[%s2] sm:$0xf]
      %v118 = vld [vmem:[%s2 + $0x4] sm:$0xf]
      %v119 = vld [vmem:[%s2 + $0x8] sm:$0xf]
      %v120 = vld [vmem:[%s2 + $0xc] sm:$0xf]
      %v121 = vld [vmem:[%s3] sm:$0x1]
      %v123 = vlaneseq
      %v124 = vshrl.u32 %v123, 7
      %v125 = vsub.s32 0, %v124
      %v126 = vrot.slane %v121, %v125
      %v132 = vunpack.c.l.b16 %v117
      %v133 = vunpack.c.l.b16 %v118
      %v134 = vunpack.c.l.b16 %v119
      %v135 = vunpack.c.l.b16 %v120
      %v136 = vpack.c.b16 %v133, %v132
      %v137 = vpack.c.b16 %v135, %v134
      %vm140 = vcmask 261120
      %v142 = vsel %vm140, %v116, 0
      %144 = vmatprep.subr.bf16.mxu0 0
      %145 = vmatpush1.bf16.msra.mxu0 %v136
      %146 = vmatprep.subr.bf16.mxu0 0
      %147 = vmatpush1.bf16.msra.mxu0 %v137
      %148 = vmatprep.subr.bf16.mxu0 0
      %149 = vmatpush1.bf16.msra.mxu0 0
      %150 = vmatprep.subr.bf16.mxu0 0
      %151 = vmatpush1.bf16.msra.mxu0 0
      %152 = vmatprep.subr.bf16.mxu0 0
      %153 = vmatpush1.bf16.msra.mxu0 0
      %154 = vmatprep.subr.bf16.mxu0 0
      %155 = vmatpush1.bf16.msra.mxu0 0
      %156 = vmatprep.subr.bf16.mxu0 0
      %157 = vmatpush1.bf16.msra.mxu0 0
      %158 = vmatprep.subr.bf16.mxu0 0
      %159 = vmatpush1.bf16.msra.mxu0 0
      %160 = vmatprep.subr.bf16.mxu0 0
      %161 = vmatpush1.bf16.msra.mxu0 0
      %162 = vmatprep.subr.bf16.mxu0 0
      %163 = vmatpush1.bf16.msra.mxu0 0
      %164 = vmatprep.subr.bf16.mxu0 0
      %165 = vmatpush1.bf16.msra.mxu0 0
      %166 = vmatprep.subr.bf16.mxu0 0
      %167 = vmatpush1.bf16.msra.mxu0 0
      %168 = vmatprep.subr.bf16.mxu0 0
      %169 = vmatpush1.bf16.msra.mxu0 0
      %170 = vmatprep.subr.bf16.mxu0 0
      %171 = vmatpush1.bf16.msra.mxu0 0
      %172 = vmatprep.subr.bf16.mxu0 0
      %173 = vmatpush1.bf16.msra.mxu0 0
      %174 = vmatprep.subr.bf16.mxu0 0
      %175 = vmatpush1.bf16.msra.mxu0 0
      %176 = vmatprep.mubr.bf16.mxu0 0
      %177 = vmatmul.mubr.bf16.gmra.mrb[0].mxu0 %v142
      %v178 = vpop.f32.mrb[0].mxu0
      %v179 = vadd.f32 %v126, %v178
      %v180 = vpop.f32.mrb[0].mxu0
      %v181 = vpop.f32.mrb[0].mxu0
      %v182 = vpop.f32.mrb[0].mxu0
      %183 = vdwg.mxu0
      %vm184 = vcmask 254976
      %v185 = vsel %vm184, %v179, 0.0
      %v186 = vrot.slane %v185, 4
      %v187 = vadd.f32 %v185, %v186
      %v188 = vrot.slane %v187, 2
      %v189 = vadd.f32 %v187, %v188
      %v190 = vrot.slane %v189, 1
      %v191 = vadd.f32 %v189, %v190
      %v192 = vrcp.pop 2.0
      %v193 = vmul.f32 %v191, %v192
      %v194 = vsub.f32 %v179, %v193
      %v195 = vmul.f32 %v194, %v194
      %v196 = vsel %vm184, %v195, 0.0
      %v197 = vrot.slane %v196, 4
      %v198 = vadd.f32 %v196, %v197
      %v199 = vrot.slane %v198, 2
      %v200 = vadd.f32 %v198, %v199
      %v201 = vrot.slane %v200, 1
      %v202 = vadd.f32 %v200, %v201
      %v203 = vmul.f32 %v202, %v192
      %v204 = vadd.f32 %v203, 1e-05
      %v205 = vrsqrt.pop %v204
      %v206 = vmul.f32 %v194, %v205
      %v207 = vld [vmem:[%s4] sm:$0x1]
      %v209 = vlaneseq
      %v210 = vshrl.u32 %v209, 7
      %v211 = vsub.s32 0, %v210
      %v212 = vrot.slane %v207, %v211
      %v214 = vmul.f32 %v206, %v212
      %v215 = vld [vmem:[%s5] sm:$0x1]
      %v217 = vlaneseq
      %v218 = vshrl.u32 %v217, 7
      %v219 = vsub.s32 0, %v218
      %v220 = vrot.slane %v215, %v219
      %v222 = vadd.f32 %v214, %v220
      %v223 = vmax.f32 %v222, 0.0
      %v224 = vpack.c.bf16 %v223, %v223
      %v225 = vld [vmem:[%s6] sm:$0xf]
      %v226 = vld [vmem:[%s6 + $0x4] sm:$0xf]
      %v227 = vld [vmem:[%s6 + $0x8] sm:$0xf]
      %v228 = vld [vmem:[%s6 + $0xc] sm:$0xf]
      %v229 = vld [vmem:[%s7] sm:$0x1]
      %v231 = vlaneseq
      %v232 = vshrl.u32 %v231, 7
      %v233 = vsub.s32 0, %v232
      %v234 = vrot.slane %v229, %v233
      %v240 = vunpack.c.l.b16 %v225
      %v241 = vunpack.c.l.b16 %v226
      %v242 = vunpack.c.l.b16 %v227
      %v243 = vunpack.c.l.b16 %v228
      %v244 = vpack.c.b16 %v241, %v240
      %v245 = vpack.c.b16 %v243, %v242
      %v249 = vsel %vm140, %v224, 0
      %251 = vmatprep.subr.bf16.mxu0 0
      %252 = vmatpush1.bf16.msra.mxu0 %v244
      %253 = vmatprep.subr.bf16.mxu0 0
      %254 = vmatpush1.bf16.msra.mxu0 %v245
      %255 = vmatprep.subr.bf16.mxu0 0
      %256 = vmatpush1.bf16.msra.mxu0 0
      %257 = vmatprep.subr.bf16.mxu0 0
      %258 = vmatpush1.bf16.msra.mxu0 0
      %259 = vmatprep.subr.bf16.mxu0 0
      %260 = vmatpush1.bf16.msra.mxu0 0
      %261 = vmatprep.subr.bf16.mxu0 0
      %262 = vmatpush1.bf16.msra.mxu0 0
      %263 = vmatprep.subr.bf16.mxu0 0
      %264 = vmatpush1.bf16.msra.mxu0 0
      %265 = vmatprep.subr.bf16.mxu0 0
      %266 = vmatpush1.bf16.msra.mxu0 0
      %267 = vmatprep.subr.bf16.mxu0 0
      %268 = vmatpush1.bf16.msra.mxu0 0
      %269 = vmatprep.subr.bf16.mxu0 0
      %270 = vmatpush1.bf16.msra.mxu0 0
      %271 = vmatprep.subr.bf16.mxu0 0
      %272 = vmatpush1.bf16.msra.mxu0 0
      %273 = vmatprep.subr.bf16.mxu0 0
      %274 = vmatpush1.bf16.msra.mxu0 0
      %275 = vmatprep.subr.bf16.mxu0 0
      %276 = vmatpush1.bf16.msra.mxu0 0
      %277 = vmatprep.subr.bf16.mxu0 0
      %278 = vmatpush1.bf16.msra.mxu0 0
      %279 = vmatprep.subr.bf16.mxu0 0
      %280 = vmatpush1.bf16.msra.mxu0 0
      %281 = vmatprep.subr.bf16.mxu0 0
      %282 = vmatpush1.bf16.msra.mxu0 0
      %283 = vmatprep.mubr.bf16.mxu0 0
      %284 = vmatmul.mubr.bf16.gmra.mrb[0].mxu0 %v249
      %v285 = vpop.f32.mrb[0].mxu0
      %v286 = vadd.f32 %v234, %v285
      %v287 = vpop.f32.mrb[0].mxu0
      %v288 = vpop.f32.mrb[0].mxu0
      %v289 = vpop.f32.mrb[0].mxu0
      %290 = vdwg.mxu0
      %291 = vst [vmem:[#allocation3] sm:$0x3] %v286
    $region41: #{global_block_forward.1} parent=1 // pred_fallthru
      _
    // Predicated region
    $region42: #{global_block_forward.1} parent=1 // pred_check
      _
    $region43: #{global_block_forward.1} parent=1 // pred_check_branch
      %293 = sbr.rel (0) target = $region45
    $region44: #{global_block_forward.1} parent=1 // pred_region
      %s295 = ssub.s32 32, 32
      %296 = vsyncadd [#allocation4], %s295
      %s298 = sshll.u32 [#allocation3], 4
      %s299 = int_to_ptr.vmem [resolvable:$true] %s298
      %301 = dma.vmem_to_hbm [thread:$0]  %s299, 32, %s8, [#allocation4]
    $region45: #{global_block_forward.1} parent=1 // pred_fallthru
      _
    // Predicated region
    $region46: #{global_block_forward.1} parent=1 // pred_check
      _
    $region47: #{global_block_forward.1} parent=1 // pred_check_branch
      %303 = sbr.rel (0) target = $region49
    $region48: #{global_block_forward.1} parent=1 // pred_region
      %304 = dma.done [#allocation4], 32
    $region49: #{global_block_forward.1} parent=1 // pred_fallthru
      _
    %305 = vsyncpa [#allocation4], 1

</llo_original>
